<compile_context>
chip_gen: v6e
topology: v6e:2x2x1
jax: 0.10.0
libtpu: 0.0.40
codegen_flags: <defaults>
</compile_context>

<pallas_src>
import jax
import jax.numpy as jnp
from jax.experimental import pallas as pl
from jax.experimental.pallas import tpu as pltpu


# MXU operand dtype.  bf16 is the native MXU rate on v5e/v6e/v7x; accumulation,
# bias and ReLU stay f32.  Set to jnp.float32 for bit-closer numerics.
_COMPUTE_DTYPE = jnp.bfloat16


def _double_conv_kernel(x_ref, w1_ref, b1_ref, w2_ref, b2_ref, o_ref,
                        col1_ref, col2_ref):
    """Fused conv3x3+ReLU, conv3x3+ReLU for `nb` images per grid step.

    x_ref   : (nb, H, WC1)     lane-dense input slab (W and padded Cin in lanes)
    w1_ref  : (3*WC1, WC2)     conv1 banded weights, dy taps merged along K (bf16)
    b1_ref  : (1, WC2)         conv1 bias tiled over W (f32)
    w2_ref  : (3*WC2, WC2)     conv2 banded weights (bf16)
    b2_ref  : (1, WC2)         conv2 bias tiled over W (f32)
    o_ref   : (nb, H, WC2)     lane-dense output slab
    col1_ref: (nb, H, 3*WC1)   VMEM im2col scratch for conv1 (f32)
    col2_ref: (nb, H, 3*WC2)   VMEM im2col scratch for conv2 (f32)
    """
    nb, H, WC1 = x_ref.shape
    WC2 = o_ref.shape[2]
    cdt = w1_ref.dtype

    # Zero ONLY the height-halo slices (rows "-1" and "H" of the dy=0 / dy=2
    # segments); everything else is fully rewritten below.  No full-scratch fill.
    col1_ref[:, 0:1, 0:WC1] = jnp.zeros((nb, 1, WC1), col1_ref.dtype)
    col1_ref[:, H - 1:H, 2 * WC1:3 * WC1] = jnp.zeros((nb, 1, WC1), col1_ref.dtype)
    col2_ref[:, 0:1, 0:WC2] = jnp.zeros((nb, 1, WC2), col2_ref.dtype)
    col2_ref[:, H - 1:H, 2 * WC2:3 * WC2] = jnp.zeros((nb, 1, WC2), col2_ref.dtype)

    # ---- conv1 im2col: output row h sees padded rows [h-1, h, h+1] ------------
    xv = x_ref[...]
    col1_ref[:, pl.ds(1, H - 1), 0:WC1] = xv[:, 0:H - 1, :]          # dy=0 -> x[h-1]
    col1_ref[:, :, WC1:2 * WC1] = xv                                  # dy=1 -> x[h]
    col1_ref[:, pl.ds(0, H - 1), 2 * WC1:3 * WC1] = xv[:, 1:H, :]     # dy=2 -> x[h+1]

    # ---- conv1 + ReLU: ONE (nb*H, 3*WC1) @ (3*WC1, WC2) MXU matmul ------------
    lhs1 = col1_ref[...].reshape(nb * H, 3 * WC1).astype(cdt)
    acc1 = jnp.dot(lhs1, w1_ref[...], preferred_element_type=jnp.float32)
    y1 = jnp.maximum(acc1 + b1_ref[...], 0.0).reshape(nb, H, WC2)

    # ---- conv2 im2col on the VMEM-resident intermediate -----------------------
    col2_ref[:, pl.ds(1, H - 1), 0:WC2] = y1[:, 0:H - 1, :]
    col2_ref[:, :, WC2:2 * WC2] = y1
    col2_ref[:, pl.ds(0, H - 1), 2 * WC2:3 * WC2] = y1[:, 1:H, :]

    # ---- conv2 + ReLU ----------------------------------------------------------
    lhs2 = col2_ref[...].reshape(nb * H, 3 * WC2).astype(cdt)
    acc2 = jnp.dot(lhs2, w2_ref[...], preferred_element_type=jnp.float32)
    y2 = jnp.maximum(acc2 + b2_ref[...], 0.0)
    o_ref[...] = y2.reshape(nb, H, WC2).astype(o_ref.dtype)


def _banded_conv_weights(w, W, cin_pad, dtype):
    """Torch OIHW (Cout, Cin, 3, 3) -> (3*W*cin_pad, W*Cout) banded matrix.

    Rows are ordered [dy, u, ci]: a height-padded image row h+dy, flattened over
    (u, ci) into W*cin_pad lanes, multiplied by this matrix produces the dy-th
    kernel-row contribution of a 'same' 3x3 conv for every output column.  The
    width zero-padding is baked in (out-of-range dx entries are zero) and the
    zero-padded extra input channels get all-zero rows.
    """
    Cout, Cin = w.shape[0], w.shape[1]
    if cin_pad > Cin:
        w = jnp.concatenate(
            [w, jnp.zeros((Cout, cin_pad - Cin, 3, 3), w.dtype)], axis=1)
        Cin = cin_pad
    taps = jnp.transpose(w, (2, 3, 1, 0))                  # (3, 3, Cin, Cout) = [dy, dx, ci, co]
    u = jnp.arange(W)[:, None]                             # input column
    wo = jnp.arange(W)[None, :]                            # output column
    dx = u - wo + 1                                        # (W, W) tap index
    valid = (dx >= 0) & (dx <= 2)
    sel = taps[:, jnp.clip(dx, 0, 2)]                      # (3, W, W, Cin, Cout)
    sel = jnp.where(valid[None, :, :, None, None], sel, 0.0)
    band = jnp.transpose(sel, (0, 1, 3, 2, 4))             # (3, W, Cin, W, Cout)
    return band.reshape(3 * W * Cin, W * Cout).astype(dtype)


def _lane_pad_channels(cin, W):
    """Smallest c >= cin with (W*c) % 128 == 0 (full-lane input slab), kept only
    if the padding stays modest; otherwise leave cin (full-dim blocks are legal)."""
    c = next((k for k in range(cin, cin + 129) if (W * k) % 128 == 0), cin)
    return c if c <= max(8, 2 * cin) else cin


def _images_per_step(N, H):
    """Images folded into one grid step: grow matmul M = nb*H towards ~256 rows
    (well past MXU fill/drain), nb constrained to a divisor of N.
    (On v7x one may prefer to cap nb at N//2 so both TensorCores get a step.)"""
    nb = min(N, max(1, 256 // max(H, 1)))
    while N % nb:
        nb -= 1
    return nb


@jax.jit
def double_convolution(x_nchw, w1, b1, w2, b2):
    """DoubleConvolution forward. Input/output in PyTorch NCHW layout."""
    N, Cin, H, W = x_nchw.shape
    Cout = w1.shape[0]
    cin_p = _lane_pad_channels(Cin, W)
    nb = _images_per_step(N, H)
    WC1, WC2 = W * cin_p, W * Cout

    # Layout glue (cheap XLA ops): NCHW -> lane-dense (N, H, W*Cin_pad) slab.
    x = jnp.transpose(x_nchw, (0, 2, 3, 1))                          # NHWC
    if cin_p > Cin:
        x = jnp.pad(x, ((0, 0), (0, 0), (0, 0), (0, cin_p - Cin)))
    x = x.reshape(N, H, WC1)

    w1b = _banded_conv_weights(w1, W, cin_p, _COMPUTE_DTYPE)         # (3*WC1, WC2)
    w2b = _banded_conv_weights(w2, W, Cout, _COMPUTE_DTYPE)          # (3*WC2, WC2)
    b1t = jnp.tile(b1, W).reshape(1, WC2).astype(jnp.float32)
    b2t = jnp.tile(b2, W).reshape(1, WC2).astype(jnp.float32)

    # Constant operands live whole in VMEM: single-buffered, loaded once.
    const_spec = pl.BlockSpec(memory_space=pltpu.MemorySpace.VMEM)

    out = pl.pallas_call(
        _double_conv_kernel,
        out_shape=jax.ShapeDtypeStruct((N, H, WC2), x_nchw.dtype),
        grid_spec=pltpu.PrefetchScalarGridSpec(
            num_scalar_prefetch=0,
            grid=(N // nb,),
            in_specs=[
                pl.BlockSpec((nb, H, WC1), lambda n: (n, 0, 0)),     # activations
                const_spec,                                          # w1 band
                const_spec,                                          # b1 row
                const_spec,                                          # w2 band
                const_spec,                                          # b2 row
            ],
            out_specs=pl.BlockSpec((nb, H, WC2), lambda n: (n, 0, 0)),
            scratch_shapes=[
                pltpu.VMEM((nb, H, 3 * WC1), jnp.float32),           # conv1 im2col
                pltpu.VMEM((nb, H, 3 * WC2), jnp.float32),           # conv2 im2col
            ],
        ),
        compiler_params=pltpu.CompilerParams(
            dimension_semantics=("parallel",)),
    )(x, w1b, b1t, w2b, b2t)

    # (N, H, W*Cout) -> (N, H, W, Cout) -> NCHW
    return jnp.transpose(out.reshape(N, H, W, Cout), (0, 3, 1, 2))


def _reference(x, w1, b1, w2, b2):
    """Pure-JAX f32 reference (matches nn.Conv2d(kernel=3, padding=1) + ReLU, twice)."""
    def conv_relu(x, w, b):
        y = jax.lax.conv_general_dilated(
            x, w, window_strides=(1, 1), padding=((1, 1), (1, 1)),
            dimension_numbers=("NCHW", "OIHW", "NCHW"))
        return jnp.maximum(y + b[None, :, None, None], 0.0)
    return conv_relu(conv_relu(x, w1, b1), w2, b2)


if __name__ == "__main__":
    in_channels, out_channels = 4, 8
    N, H, W = 2, 16, 16

    key = jax.random.PRNGKey(0)
    kx, kw1, kb1, kw2, kb2 = jax.random.split(key, 5)

    x = jax.random.normal(kx, (N, in_channels, H, W), dtype=jnp.float32)
    # Deterministic synthetic parameters (shapes follow nn.Conv2d(..., 3, padding=1)).
    w1 = 0.1 * jax.random.normal(kw1, (out_channels, in_channels, 3, 3), jnp.float32)
    b1 = 0.1 * jax.random.normal(kb1, (out_channels,), jnp.float32)
    w2 = 0.1 * jax.random.normal(kw2, (out_channels, out_channels, 3, 3), jnp.float32)
    b2 = 0.1 * jax.random.normal(kb2, (out_channels,), jnp.float32)

    out = jax.block_until_ready(double_convolution(x, w1, b1, w2, b2))

    ref = _reference(x, w1, b1, w2, b2)
    assert out.shape == (N, out_channels, H, W)
    # bf16 MXU operands with f32 accumulation: expect ~1e-2 worst case vs f32 ref.
    max_err = float(jnp.max(jnp.abs(out - ref)))
    assert max_err < 5e-2, f"mismatch vs reference: {max_err}"

    print("KERNEL_OK")
</pallas_src>

<mosaic_0001>
module attributes {stable_mosaic.version = 11 : i64} {
  func.func @_double_conv_kernel(%arg0: i32, %arg1: memref<2x16x128xf32, #tpu.memory_space<vmem>>, %arg2: memref<384x128xbf16, #tpu.memory_space<vmem>>, %arg3: memref<1x128xf32, #tpu.memory_space<vmem>>, %arg4: memref<384x128xbf16, #tpu.memory_space<vmem>>, %arg5: memref<1x128xf32, #tpu.memory_space<vmem>>, %arg6: memref<2x16x128xf32, #tpu.memory_space<vmem>>, %arg7: memref<2x16x384xf32, #tpu.memory_space<vmem>>, %arg8: memref<2x16x384xf32, #tpu.memory_space<vmem>>) attributes {dimension_semantics = [#tpu.dimension_semantics<parallel>], iteration_bounds = array<i64: 1>, scalar_prefetch = 0 : i64, scratch_operands = 2 : i64, tpu.core_type = #tpu.core_type<tc>, window_params = [{transform_indices = @transform_0, window_bounds = array<i64: 2, 16, 128>}, {pipeline_mode = #tpu.pipeline_mode<synchronous>, transform_indices = @transform_1, window_bounds = array<i64: 384, 128>}, {pipeline_mode = #tpu.pipeline_mode<synchronous>, transform_indices = @transform_2, window_bounds = array<i64: 1, 128>}, {pipeline_mode = #tpu.pipeline_mode<synchronous>, transform_indices = @transform_3, window_bounds = array<i64: 384, 128>}, {pipeline_mode = #tpu.pipeline_mode<synchronous>, transform_indices = @transform_4, window_bounds = array<i64: 1, 128>}, {transform_indices = @transform_5, window_bounds = array<i64: 2, 16, 128>}]} {
    %cst = arith.constant 0.000000e+00 : f32
    %0 = vector.broadcast %cst : f32 to vector<2x1x128xf32>
    %c0 = arith.constant 0 : index
    %c0_0 = arith.constant 0 : index
    %c0_1 = arith.constant 0 : index
    %1 = vector.load %arg7[%c0, %c0_0, %c0_1] : memref<2x16x384xf32, #tpu.memory_space<vmem>>, vector<2x1x128xf32>
    tpu.vector_store %arg7[%c0, %c0_0, %c0_1], %0 {strides = array<i32>} : memref<2x16x384xf32, #tpu.memory_space<vmem>>, vector<2x1x128xf32>,
    %cst_2 = arith.constant 0.000000e+00 : f32
    %2 = vector.broadcast %cst_2 : f32 to vector<2x1x128xf32>
    %c0_3 = arith.constant 0 : index
    %c15 = arith.constant 15 : index
    %c256 = arith.constant 256 : index
    %3 = vector.load %arg7[%c0_3, %c15, %c256] : memref<2x16x384xf32, #tpu.memory_space<vmem>>, vector<2x1x128xf32>
    tpu.vector_store %arg7[%c0_3, %c15, %c256], %2 {strides = array<i32>} : memref<2x16x384xf32, #tpu.memory_space<vmem>>, vector<2x1x128xf32>,
    %cst_4 = arith.constant 0.000000e+00 : f32
    %4 = vector.broadcast %cst_4 : f32 to vector<2x1x128xf32>
    %c0_5 = arith.constant 0 : index
    %c0_6 = arith.constant 0 : index
    %c0_7 = arith.constant 0 : index
    %5 = vector.load %arg8[%c0_5, %c0_6, %c0_7] : memref<2x16x384xf32, #tpu.memory_space<vmem>>, vector<2x1x128xf32>
    tpu.vector_store %arg8[%c0_5, %c0_6, %c0_7], %4 {strides = array<i32>} : memref<2x16x384xf32, #tpu.memory_space<vmem>>, vector<2x1x128xf32>,
    %cst_8 = arith.constant 0.000000e+00 : f32
    %6 = vector.broadcast %cst_8 : f32 to vector<2x1x128xf32>
    %c0_9 = arith.constant 0 : index
    %c15_10 = arith.constant 15 : index
    %c256_11 = arith.constant 256 : index
    %7 = vector.load %arg8[%c0_9, %c15_10, %c256_11] : memref<2x16x384xf32, #tpu.memory_space<vmem>>, vector<2x1x128xf32>
    tpu.vector_store %arg8[%c0_9, %c15_10, %c256_11], %6 {strides = array<i32>} : memref<2x16x384xf32, #tpu.memory_space<vmem>>, vector<2x1x128xf32>,
    %c0_12 = arith.constant 0 : index
    %c0_13 = arith.constant 0 : index
    %c0_14 = arith.constant 0 : index
    %8 = vector.load %arg1[%c0_12, %c0_13, %c0_14] : memref<2x16x128xf32, #tpu.memory_space<vmem>>, vector<2x16x128xf32>
    %9 = vector.extract_strided_slice %8 {offsets = [0, 0, 0], sizes = [2, 15, 128], strides = [1, 1, 1]} : vector<2x16x128xf32> to vector<2x15x128xf32>
    %c0_15 = arith.constant 0 : index
    %c1 = arith.constant 1 : index
    %c0_16 = arith.constant 0 : index
    %10 = vector.load %arg7[%c0_15, %c1, %c0_16] : memref<2x16x384xf32, #tpu.memory_space<vmem>>, vector<2x15x128xf32>
    tpu.vector_store %arg7[%c0_15, %c1, %c0_16], %9 {strides = array<i32>} : memref<2x16x384xf32, #tpu.memory_space<vmem>>, vector<2x15x128xf32>,
    %c0_17 = arith.constant 0 : index
    %c0_18 = arith.constant 0 : index
    %c128 = arith.constant 128 : index
    %11 = vector.load %arg7[%c0_17, %c0_18, %c128] : memref<2x16x384xf32, #tpu.memory_space<vmem>>, vector<2x16x128xf32>
    tpu.vector_store %arg7[%c0_17, %c0_18, %c128], %8 {strides = array<i32>} : memref<2x16x384xf32, #tpu.memory_space<vmem>>, vector<2x16x128xf32>,
    %12 = vector.extract_strided_slice %8 {offsets = [0, 1, 0], sizes = [2, 15, 128], strides = [1, 1, 1]} : vector<2x16x128xf32> to vector<2x15x128xf32>
    %c0_19 = arith.constant 0 : index
    %c0_20 = arith.constant 0 : index
    %c256_21 = arith.constant 256 : index
    %13 = vector.load %arg7[%c0_19, %c0_20, %c256_21] : memref<2x16x384xf32, #tpu.memory_space<vmem>>, vector<2x15x128xf32>
    tpu.vector_store %arg7[%c0_19, %c0_20, %c256_21], %12 {strides = array<i32>} : memref<2x16x384xf32, #tpu.memory_space<vmem>>, vector<2x15x128xf32>,
    %c0_22 = arith.constant 0 : index
    %c0_23 = arith.constant 0 : index
    %c0_24 = arith.constant 0 : index
    %14 = vector.load %arg7[%c0_22, %c0_23, %c0_24] : memref<2x16x384xf32, #tpu.memory_space<vmem>>, vector<2x16x384xf32>
    %15 = vector.shape_cast %14 : vector<2x16x384xf32> to vector<32x384xf32>
    %16 = arith.truncf %15 : vector<32x384xf32> to vector<32x384xbf16>
    %c0_25 = arith.constant 0 : index
    %c0_26 = arith.constant 0 : index
    %17 = vector.load %arg2[%c0_25, %c0_26] : memref<384x128xbf16, #tpu.memory_space<vmem>>, vector<384x128xbf16>
    %cst_27 = arith.constant dense<0.000000e+00> : vector<32x128xf32>
    %18 = tpu.matmul %16, %17, %cst_27 {dimension_numbers = #tpu.dot_dimension_numbers<[1], [0], [0], [1], [0, 0, 1, 1], [], []>} : vector<32x384xbf16>, vector<384x128xbf16>, vector<32x128xf32> -> vector<32x128xf32>
    %c0_28 = arith.constant 0 : index
    %c0_29 = arith.constant 0 : index
    %19 = vector.load %arg3[%c0_28, %c0_29] : memref<1x128xf32, #tpu.memory_space<vmem>>, vector<1x128xf32>
    %20 = vector.broadcast %19 : vector<1x128xf32> to vector<32x128xf32>
    %21 = arith.addf %18, %20 : vector<32x128xf32>
    %cst_30 = arith.constant 0.000000e+00 : f32
    %22 = vector.broadcast %cst_30 : f32 to vector<32x128xf32>
    %23 = arith.maximumf %21, %22 : vector<32x128xf32>
    %24 = vector.shape_cast %23 : vector<32x128xf32> to vector<2x16x128xf32>
    %25 = vector.extract_strided_slice %24 {offsets = [0, 0, 0], sizes = [2, 15, 128], strides = [1, 1, 1]} : vector<2x16x128xf32> to vector<2x15x128xf32>
    %c0_31 = arith.constant 0 : index
    %c1_32 = arith.constant 1 : index
    %c0_33 = arith.constant 0 : index
    %26 = vector.load %arg8[%c0_31, %c1_32, %c0_33] : memref<2x16x384xf32, #tpu.memory_space<vmem>>, vector<2x15x128xf32>
    tpu.vector_store %arg8[%c0_31, %c1_32, %c0_33], %25 {strides = array<i32>} : memref<2x16x384xf32, #tpu.memory_space<vmem>>, vector<2x15x128xf32>,
    %c0_34 = arith.constant 0 : index
    %c0_35 = arith.constant 0 : index
    %c128_36 = arith.constant 128 : index
    %27 = vector.load %arg8[%c0_34, %c0_35, %c128_36] : memref<2x16x384xf32, #tpu.memory_space<vmem>>, vector<2x16x128xf32>
    tpu.vector_store %arg8[%c0_34, %c0_35, %c128_36], %24 {strides = array<i32>} : memref<2x16x384xf32, #tpu.memory_space<vmem>>, vector<2x16x128xf32>,
    %28 = vector.extract_strided_slice %24 {offsets = [0, 1, 0], sizes = [2, 15, 128], strides = [1, 1, 1]} : vector<2x16x128xf32> to vector<2x15x128xf32>
    %c0_37 = arith.constant 0 : index
    %c0_38 = arith.constant 0 : index
    %c256_39 = arith.constant 256 : index
    %29 = vector.load %arg8[%c0_37, %c0_38, %c256_39] : memref<2x16x384xf32, #tpu.memory_space<vmem>>, vector<2x15x128xf32>
    tpu.vector_store %arg8[%c0_37, %c0_38, %c256_39], %28 {strides = array<i32>} : memref<2x16x384xf32, #tpu.memory_space<vmem>>, vector<2x15x128xf32>,
    %c0_40 = arith.constant 0 : index
    %c0_41 = arith.constant 0 : index
    %c0_42 = arith.constant 0 : index
    %30 = vector.load %arg8[%c0_40, %c0_41, %c0_42] : memref<2x16x384xf32, #tpu.memory_space<vmem>>, vector<2x16x384xf32>
    %31 = vector.shape_cast %30 : vector<2x16x384xf32> to vector<32x384xf32>
    %32 = arith.truncf %31 : vector<32x384xf32> to vector<32x384xbf16>
    %c0_43 = arith.constant 0 : index
    %c0_44 = arith.constant 0 : index
    %33 = vector.load %arg4[%c0_43, %c0_44] : memref<384x128xbf16, #tpu.memory_space<vmem>>, vector<384x128xbf16>
    %cst_45 = arith.constant dense<0.000000e+00> : vector<32x128xf32>
    %34 = tpu.matmul %32, %33, %cst_45 {dimension_numbers = #tpu.dot_dimension_numbers<[1], [0], [0], [1], [0, 0, 1, 1], [], []>} : vector<32x384xbf16>, vector<384x128xbf16>, vector<32x128xf32> -> vector<32x128xf32>
    %c0_46 = arith.constant 0 : index
    %c0_47 = arith.constant 0 : index
    %35 = vector.load %arg5[%c0_46, %c0_47] : memref<1x128xf32, #tpu.memory_space<vmem>>, vector<1x128xf32>
    %36 = vector.broadcast %35 : vector<1x128xf32> to vector<32x128xf32>
    %37 = arith.addf %34, %36 : vector<32x128xf32>
    %cst_48 = arith.constant 0.000000e+00 : f32
    %38 = vector.broadcast %cst_48 : f32 to vector<32x128xf32>
    %39 = arith.maximumf %37, %38 : vector<32x128xf32>
    %40 = vector.shape_cast %39 : vector<32x128xf32> to vector<2x16x128xf32>
    %c0_49 = arith.constant 0 : index
    %c0_50 = arith.constant 0 : index
    %c0_51 = arith.constant 0 : index
    %41 = vector.load %arg6[%c0_49, %c0_50, %c0_51] : memref<2x16x128xf32, #tpu.memory_space<vmem>>, vector<2x16x128xf32>
    tpu.vector_store %arg6[%c0_49, %c0_50, %c0_51], %40 {strides = array<i32>} : memref<2x16x128xf32, #tpu.memory_space<vmem>>, vector<2x16x128xf32>,
    return
  }
  func.func @transform_0(%arg0: i32) -> (i32, i32, i32) {
    %c0_i32 = arith.constant 0 : i32
    %c0_i32_0 = arith.constant 0 : i32
    %c0_i32_1 = arith.constant 0 : i32
    return %arg0, %c0_i32, %c0_i32_0 : i32, i32, i32
  }
  func.func @transform_1(%arg0: i32) -> (i32, i32) {
    %c0_i32 = arith.constant 0 : i32
    %c0_i32_0 = arith.constant 0 : i32
    %c0_i32_1 = arith.constant 0 : i32
    return %c0_i32, %c0_i32_0 : i32, i32
  }
  func.func @transform_2(%arg0: i32) -> (i32, i32) {
    %c0_i32 = arith.constant 0 : i32
    %c0_i32_0 = arith.constant 0 : i32
    %c0_i32_1 = arith.constant 0 : i32
    return %c0_i32, %c0_i32_0 : i32, i32
  }
  func.func @transform_3(%arg0: i32) -> (i32, i32) {
    %c0_i32 = arith.constant 0 : i32
    %c0_i32_0 = arith.constant 0 : i32
    %c0_i32_1 = arith.constant 0 : i32
    return %c0_i32, %c0_i32_0 : i32, i32
  }
  func.func @transform_4(%arg0: i32) -> (i32, i32) {
    %c0_i32 = arith.constant 0 : i32
    %c0_i32_0 = arith.constant 0 : i32
    %c0_i32_1 = arith.constant 0 : i32
    return %c0_i32, %c0_i32_0 : i32, i32
  }
  func.func @transform_5(%arg0: i32) -> (i32, i32, i32) {
    %c0_i32 = arith.constant 0 : i32
    %c0_i32_0 = arith.constant 0 : i32
    %c0_i32_1 = arith.constant 0 : i32
    return %arg0, %c0_i32, %c0_i32_0 : i32, i32, i32
  }
}

</mosaic_0001>

<llo_original>
// kernel: tile.13
$region0: #{tile.13}
  #allocation0 [shape = 's32[1]{0}', space=sflag, size = 0x4, scoped, tag = 'scoped memory for tile.13']
  %s0 = inlined_call_operand.vmem [shape: f32[8], index: 0, kind: input, shape index: {}]
  %s1 = inlined_call_operand.vmem [shape: f32[16,8], index: 1, kind: output, shape index: {}]
  // Predicated region
  $region2: #{tile.13} parent=0 // pred_check
    _
  $region3: #{tile.13} parent=0 // pred_check_branch
    %3 = sbr.rel (0) target = $region5
  $region4: #{tile.13} parent=0 // pred_region
    _
  $region5: #{tile.13} parent=0 // pred_fallthru
    _
  %v4 = vld [vmem:[%s0] ss:$0 sm:$0xff]
  %5 = vst [vmem:[%s1] sm:$0xff] %v4
  %s6 = scalar_lea.vmem %s1, 8
  %7 = vst [vmem:[%s6] sm:$0xff] %v4

// kernel: tile.14
$region0: #{tile.14}
  %s0 = inlined_call_operand.vmem [shape: f32[16,8], index: 0, kind: input, shape index: {}]
  %s1 = inlined_call_operand.vmem [shape: f32[1,128], index: 1, kind: output, shape index: {}]
  $region1: #{tile.14} parent=0
    #allocation0 [shape = 'u8[4096]{0}', space=vmem, size = 0x1000, scoped, tag = 'scoped mem for output reshape']
    %v2 = vld [vmem:[%s0] sm:$0x1]
    %vm3 = vcmask 64512
    %4 = vst.msk [vmem:[#allocation0] sm:$0x1] %vm3, %v2
    %s5 = scalar_lea.vmem %s0, 15
    %v6 = vld [vmem:[%s5] sm:$0x1]
    %7 = vrot.lane.b32.xlu0 %v6, 120
    %v8 = vpop.permute.xlu0 %7
    %vm9 = vcmask 1048512
    %10 = vst.msk [vmem:[#allocation0] sm:$0x1] %vm9, %v8
    %s11 = scalar_lea.vmem %s0, 14
    %v12 = vld [vmem:[%s11] sm:$0x1]
    %13 = vrot.lane.b32.xlu0 %v12, 112
    %v14 = vpop.permute.xlu0 %13
    %vm15 = vcmask 982912
    %16 = vst.msk [vmem:[#allocation0] sm:$0x1] %vm15, %v14
    %s17 = scalar_lea.vmem %s0, 13
    %v18 = vld [vmem:[%s17] sm:$0x1]
    %19 = vrot.lane.b32.xlu0 %v18, 104
    %v20 = vpop.permute.xlu0 %19
    %vm21 = vcmask 917312
    %22 = vst.msk [vmem:[#allocation0] sm:$0x1] %vm21, %v20
    %s23 = scalar_lea.vmem %s0, 12
    %v24 = vld [vmem:[%s23] sm:$0x1]
    %25 = vrot.lane.b32.xlu0 %v24, 96
    %v26 = vpop.permute.xlu0 %25
    %vm27 = vcmask 851712
    %28 = vst.msk [vmem:[#allocation0] sm:$0x1] %vm27, %v26
    %s29 = scalar_lea.vmem %s0, 11
    %v30 = vld [vmem:[%s29] sm:$0x1]
    %31 = vrot.lane.b32.xlu0 %v30, 88
    %v32 = vpop.permute.xlu0 %31
    %vm33 = vcmask 786112
    %34 = vst.msk [vmem:[#allocation0] sm:$0x1] %vm33, %v32
    %s35 = scalar_lea.vmem %s0, 10
    %v36 = vld [vmem:[%s35] sm:$0x1]
    %37 = vrot.lane.b32.xlu0 %v36, 80
    %v38 = vpop.permute.xlu0 %37
    %vm39 = vcmask 720512
    %40 = vst.msk [vmem:[#allocation0] sm:$0x1] %vm39, %v38
    %s41 = scalar_lea.vmem %s0, 9
    %v42 = vld [vmem:[%s41] sm:$0x1]
    %43 = vrot.lane.b32.xlu0 %v42, 72
    %v44 = vpop.permute.xlu0 %43
    %vm45 = vcmask 654912
    %46 = vst.msk [vmem:[#allocation0] sm:$0x1] %vm45, %v44
    %s47 = scalar_lea.vmem %s0, 8
    %v48 = vld [vmem:[%s47] sm:$0x1]
    %49 = vrot.lane.b32.xlu0 %v48, 64
    %v50 = vpop.permute.xlu0 %49
    %vm51 = vcmask 589312
    %52 = vst.msk [vmem:[#allocation0] sm:$0x1] %vm51, %v50
    %s53 = scalar_lea.vmem %s0, 7
    %v54 = vld [vmem:[%s53] sm:$0x1]
    %55 = vrot.lane.b32.xlu0 %v54, 56
    %v56 = vpop.permute.xlu0 %55
    %vm57 = vcmask 523712
    %58 = vst.msk [vmem:[#allocation0] sm:$0x1] %vm57, %v56
    %s59 = scalar_lea.vmem %s0, 6
    %v60 = vld [vmem:[%s59] sm:$0x1]
    %61 = vrot.lane.b32.xlu0 %v60, 48
    %v62 = vpop.permute.xlu0 %61
    %vm63 = vcmask 458112
    %64 = vst.msk [vmem:[#allocation0] sm:$0x1] %vm63, %v62
    %s65 = scalar_lea.vmem %s0, 5
    %v66 = vld [vmem:[%s65] sm:$0x1]
    %67 = vrot.lane.b32.xlu0 %v66, 40
    %v68 = vpop.permute.xlu0 %67
    %vm69 = vcmask 392512
    %70 = vst.msk [vmem:[#allocation0] sm:$0x1] %vm69, %v68
    %s71 = scalar_lea.vmem %s0, 4
    %v72 = vld [vmem:[%s71] sm:$0x1]
    %73 = vrot.lane.b32.xlu0 %v72, 32
    %v74 = vpop.permute.xlu0 %73
    %vm75 = vcmask 326912
    %76 = vst.msk [vmem:[#allocation0] sm:$0x1] %vm75, %v74
    %s77 = scalar_lea.vmem %s0, 3
    %v78 = vld [vmem:[%s77] sm:$0x1]
    %79 = vrot.lane.b32.xlu0 %v78, 24
    %v80 = vpop.permute.xlu0 %79
    %vm81 = vcmask 261312
    %82 = vst.msk [vmem:[#allocation0] sm:$0x1] %vm81, %v80
    %s83 = scalar_lea.vmem %s0, 2
    %v84 = vld [vmem:[%s83] sm:$0x1]
    %85 = vrot.lane.b32.xlu0 %v84, 16
    %v86 = vpop.permute.xlu0 %85
    %vm87 = vcmask 195712
    %88 = vst.msk [vmem:[#allocation0] sm:$0x1] %vm87, %v86
    %s89 = scalar_lea.vmem %s0, 1
    %v90 = vld [vmem:[%s89] sm:$0x1]
    %91 = vrot.lane.b32.xlu0 %v90, 8
    %v92 = vpop.permute.xlu0 %91
    %vm93 = vcmask 130112
    %94 = vst.msk [vmem:[#allocation0] sm:$0x1] %vm93, %v92
    %s96 = sshll.u32 1, 1
    %s97 = ssub.s32 %s96, 1
    %v99 = vld [vmem:[#allocation0] sm:%s97]
    %s100 = sshll.u32 1, 1
    %s101 = ssub.s32 %s100, 1
    %102 = vst [vmem:[%s1] sm:%s101] %v99

// kernel: double_convolution.1
$region0: #{double_convolution.1}
  #allocation0 [shape = 'u32[]', space=smem, size = 0x4, offset = 0x4, fixed_abs, tag = 'smem constant byte address 0x4 - core index']
  #allocation1 [shape = 'u32[144,128]{1,0:T(1,128)}', space=vmem, size = 0x12000, scoped, tag = 'internal scratch']
  #allocation2 [shape = 'f32[2,16,384]{2,1,0:T(8,128)}', space=vmem, size = 0xc000, scoped, tag = 'scratch operand']
  #allocation3 [shape = 'f32[2,16,384]{2,1,0:T(8,128)}', space=vmem, size = 0xc000, scoped, tag = 'scratch operand']
  %s0 = inlined_call_operand.vmem [shape: f32[2,16,128], index: 0, kind: input, shape index: {}]
  %s1 = inlined_call_operand.vmem [shape: bf16[384,128], index: 1, kind: input, shape index: {}]
  %s2 = inlined_call_operand.vmem [shape: f32[1,128], index: 2, kind: input, shape index: {}]
  %s3 = inlined_call_operand.vmem [shape: bf16[384,128], index: 3, kind: input, shape index: {}]
  %s4 = inlined_call_operand.vmem [shape: f32[1,128], index: 4, kind: input, shape index: {}]
  %s5 = inlined_call_operand.vmem [shape: f32[2,16,128], index: 5, kind: output, shape index: {}]
  %s6 = sld [smem:[#allocation0]]
  $region30: #{double_convolution.1} parent=0
    _
  %s8 = ssub.s32 1, %s6
  %s9 = scalar_select 0, %s8, %s6
  // Predicated region
  $region2: #{double_convolution.1} parent=0 // pred_check
    _
  $region3: #{double_convolution.1} parent=0 // pred_check_branch
    %11 = sbr.rel (0) target = $region5
  $region4: #{double_convolution.1} parent=0 // pred_region
    _
  $region5: #{double_convolution.1} parent=0 // pred_fallthru
    _
  // Predicated region
  $region6: #{double_convolution.1} parent=0 // pred_check
    _
  $region7: #{double_convolution.1} parent=0 // pred_check_branch
    %13 = sbr.rel (0) target = $region9
  $region8: #{double_convolution.1} parent=0 // pred_region
    _
  $region9: #{double_convolution.1} parent=0 // pred_fallthru
    _
  // Predicated region
  $region10: #{double_convolution.1} parent=0 // pred_check
    _
  $region11: #{double_convolution.1} parent=0 // pred_check_branch
    %15 = sbr.rel (0) target = $region13
  $region12: #{double_convolution.1} parent=0 // pred_region
    _
  $region13: #{double_convolution.1} parent=0 // pred_fallthru
    _
  // Predicated region
  $region14: #{double_convolution.1} parent=0 // pred_check
    _
  $region15: #{double_convolution.1} parent=0 // pred_check_branch
    %17 = sbr.rel (0) target = $region17
  $region16: #{double_convolution.1} parent=0 // pred_region
    _
  $region17: #{double_convolution.1} parent=0 // pred_fallthru
    _
  // Predicated region
  $region18: #{double_convolution.1} parent=0 // pred_check
    _
  $region19: #{double_convolution.1} parent=0 // pred_check_branch
    %19 = sbr.rel (0) target = $region21
  $region20: #{double_convolution.1} parent=0 // pred_region
    _
  $region21: #{double_convolution.1} parent=0 // pred_fallthru
    _
  %21 = vst [vmem:[#allocation2] sm:$0x1] 0.0
  %22 = vst [vmem:[#allocation2 + $0x30] sm:$0x1] 0.0
  %23 = vst [vmem:[#allocation2 + $0x2f] sm:$0x1] 0.0
  %24 = vst [vmem:[#allocation2 + $0x5f] sm:$0x1] 0.0
  %25 = vst [vmem:[#allocation3] sm:$0x1] 0.0
  %26 = vst [vmem:[#allocation3 + $0x30] sm:$0x1] 0.0
  %27 = vst [vmem:[#allocation3 + $0x2f] sm:$0x1] 0.0
  %28 = vst [vmem:[#allocation3 + $0x5f] sm:$0x1] 0.0
  %v29 = vld [vmem:[%s0] sm:$0xff]
  %v30 = vld [vmem:[%s0 + $0x8] sm:$0xff]
  %v31 = vld [vmem:[%s0 + $0x10] sm:$0xff]
  %v32 = vld [vmem:[%s0 + $0x18] sm:$0xff]
  %vm37 = vcmask 1040384
  %v38 = vrot.slane %v29, 7
  %v39 = vrot.slane %v30, 7
  %v40 = vsel %vm37, %v38, %v39
  %v41 = vrot.slane %v31, 7
  %v42 = vrot.slane %v32, 7
  %v43 = vsel %vm37, %v41, %v42
  %48 = vst [vmem:[#allocation2] sm:$0xfe] %v38
  %49 = vst [vmem:[#allocation2 + $0x18] sm:$0xff] %v40
  %50 = vst [vmem:[#allocation2 + $0x30] sm:$0xfe] %v41
  %51 = vst [vmem:[#allocation2 + $0x48] sm:$0xff] %v43
  %52 = vst [vmem:[#allocation2 + $0x8] sm:$0xff] %v29
  %53 = vst [vmem:[#allocation2 + $0x20] sm:$0xff] %v30
  %54 = vst [vmem:[#allocation2 + $0x38] sm:$0xff] %v31
  %55 = vst [vmem:[#allocation2 + $0x50] sm:$0xff] %v32
  %vm56 = vcmask 1046528
  %v57 = vrot.slane %v29, 1
  %v58 = vrot.slane %v30, 1
  %v59 = vsel %vm56, %v57, %v58
  %v60 = vrot.slane %v31, 1
  %v61 = vrot.slane %v32, 1
  %v62 = vsel %vm56, %v60, %v61
  %67 = vst [vmem:[#allocation2 + $0x10] sm:$0xff] %v59
  %68 = vst [vmem:[#allocation2 + $0x28] sm:$0x7f] %v58
  %69 = vst [vmem:[#allocation2 + $0x40] sm:$0xff] %v62
  %70 = vst [vmem:[#allocation2 + $0x58] sm:$0x7f] %v61
  %v71 = vld [vmem:[#allocation2] sm:$0xff]
  %v72 = vld [vmem:[#allocation2 + $0x8] sm:$0xff]
  %v73 = vld [vmem:[#allocation2 + $0x10] sm:$0xff]
  %v74 = vld [vmem:[#allocation2 + $0x18] sm:$0xff]
  %v75 = vld [vmem:[#allocation2 + $0x20] sm:$0xff]
  %v76 = vld [vmem:[#allocation2 + $0x28] sm:$0xff]
  %v77 = vld [vmem:[#allocation2 + $0x30] sm:$0xff]
  %v78 = vld [vmem:[#allocation2 + $0x38] sm:$0xff]
  %v79 = vld [vmem:[#allocation2 + $0x40] sm:$0xff]
  %v80 = vld [vmem:[#allocation2 + $0x48] sm:$0xff]
  %v81 = vld [vmem:[#allocation2 + $0x50] sm:$0xff]
  %v82 = vld [vmem:[#allocation2 + $0x58] sm:$0xff]
  %v83 = vpack.c.bf16 %v74, %v71
  %v84 = vpack.c.bf16 %v75, %v72
  %v85 = vpack.c.bf16 %v76, %v73
  %v86 = vpack.c.bf16 %v80, %v77
  %v87 = vpack.c.bf16 %v81, %v78
  %v88 = vpack.c.bf16 %v82, %v79
  %v89 = vld [vmem:[%s1] sm:$0xf]
  %v90 = vld [vmem:[%s1 + $0x4] sm:$0xf]
  %v91 = vld [vmem:[%s1 + $0x8] sm:$0xf]
  %v92 = vld [vmem:[%s1 + $0xc] sm:$0xf]
  %v93 = vld [vmem:[%s1 + $0x10] sm:$0xf]
  %v94 = vld [vmem:[%s1 + $0x14] sm:$0xf]
  %v95 = vld [vmem:[%s1 + $0x18] sm:$0xf]
  %v96 = vld [vmem:[%s1 + $0x1c] sm:$0xf]
  %v97 = vld [vmem:[%s1 + $0x20] sm:$0xf]
  %v98 = vld [vmem:[%s1 + $0x24] sm:$0xf]
  %v99 = vld [vmem:[%s1 + $0x28] sm:$0xf]
  %v100 = vld [vmem:[%s1 + $0x2c] sm:$0xf]
  %v101 = vld [vmem:[%s1 + $0x30] sm:$0xf]
  %v102 = vld [vmem:[%s1 + $0x34] sm:$0xf]
  %v103 = vld [vmem:[%s1 + $0x38] sm:$0xf]
  %v104 = vld [vmem:[%s1 + $0x3c] sm:$0xf]
  %v105 = vld [vmem:[%s1 + $0x40] sm:$0xf]
  %v106 = vld [vmem:[%s1 + $0x44] sm:$0xf]
  %v107 = vld [vmem:[%s1 + $0x48] sm:$0xf]
  %v108 = vld [vmem:[%s1 + $0x4c] sm:$0xf]
  %v109 = vld [vmem:[%s1 + $0x50] sm:$0xf]
  %v110 = vld [vmem:[%s1 + $0x54] sm:$0xf]
  %v111 = vld [vmem:[%s1 + $0x58] sm:$0xf]
  %v112 = vld [vmem:[%s1 + $0x5c] sm:$0xf]
  %v113 = vld [vmem:[%s1 + $0x60] sm:$0xf]
  %v114 = vld [vmem:[%s1 + $0x64] sm:$0xf]
  %v115 = vld [vmem:[%s1 + $0x68] sm:$0xf]
  %v116 = vld [vmem:[%s1 + $0x6c] sm:$0xf]
  %v117 = vld [vmem:[%s1 + $0x70] sm:$0xf]
  %v118 = vld [vmem:[%s1 + $0x74] sm:$0xf]
  %v119 = vld [vmem:[%s1 + $0x78] sm:$0xf]
  %v120 = vld [vmem:[%s1 + $0x7c] sm:$0xf]
  %v121 = vld [vmem:[%s1 + $0x80] sm:$0xf]
  %v122 = vld [vmem:[%s1 + $0x84] sm:$0xf]
  %v123 = vld [vmem:[%s1 + $0x88] sm:$0xf]
  %v124 = vld [vmem:[%s1 + $0x8c] sm:$0xf]
  %v125 = vld [vmem:[%s1 + $0x90] sm:$0xf]
  %v126 = vld [vmem:[%s1 + $0x94] sm:$0xf]
  %v127 = vld [vmem:[%s1 + $0x98] sm:$0xf]
  %v128 = vld [vmem:[%s1 + $0x9c] sm:$0xf]
  %v129 = vld [vmem:[%s1 + $0xa0] sm:$0xf]
  %v130 = vld [vmem:[%s1 + $0xa4] sm:$0xf]
  %v131 = vld [vmem:[%s1 + $0xa8] sm:$0xf]
  %v132 = vld [vmem:[%s1 + $0xac] sm:$0xf]
  %v133 = vld [vmem:[%s1 + $0xb0] sm:$0xf]
  %v134 = vld [vmem:[%s1 + $0xb4] sm:$0xf]
  %v135 = vld [vmem:[%s1 + $0xb8] sm:$0xf]
  %v136 = vld [vmem:[%s1 + $0xbc] sm:$0xf]
  %v137 = vld [vmem:[%s2] sm:$0x1]
  %v139 = vlaneseq
  %v140 = vshrl.u32 %v139, 7
  %v141 = vsub.s32 0, %v140
  %v142 = vrot.slane %v137, %v141
  %v192 = vunpack.c.l.b16 %v89
  %v193 = vunpack.c.l.b16 %v90
  %v194 = vunpack.c.l.b16 %v91
  %v195 = vunpack.c.l.b16 %v92
  %v196 = vunpack.c.l.b16 %v93
  %v197 = vunpack.c.l.b16 %v94
  %v198 = vunpack.c.l.b16 %v95
  %v199 = vunpack.c.l.b16 %v96
  %v200 = vunpack.c.l.b16 %v97
  %v201 = vunpack.c.l.b16 %v98
  %v202 = vunpack.c.l.b16 %v99
  %v203 = vunpack.c.l.b16 %v100
  %v204 = vunpack.c.l.b16 %v101
  %v205 = vunpack.c.l.b16 %v102
  %v206 = vunpack.c.l.b16 %v103
  %v207 = vunpack.c.l.b16 %v104
  %v208 = vunpack.c.l.b16 %v105
  %v209 = vunpack.c.l.b16 %v106
  %v210 = vunpack.c.l.b16 %v107
  %v211 = vunpack.c.l.b16 %v108
  %v212 = vunpack.c.l.b16 %v109
  %v213 = vunpack.c.l.b16 %v110
  %v214 = vunpack.c.l.b16 %v111
  %v215 = vunpack.c.l.b16 %v112
  %v216 = vunpack.c.l.b16 %v113
  %v217 = vunpack.c.l.b16 %v114
  %v218 = vunpack.c.l.b16 %v115
  %v219 = vunpack.c.l.b16 %v116
  %v220 = vunpack.c.l.b16 %v117
  %v221 = vunpack.c.l.b16 %v118
  %v222 = vunpack.c.l.b16 %v119
  %v223 = vunpack.c.l.b16 %v120
  %v224 = vunpack.c.l.b16 %v121
  %v225 = vunpack.c.l.b16 %v122
  %v226 = vunpack.c.l.b16 %v123
  %v227 = vunpack.c.l.b16 %v124
  %v228 = vunpack.c.l.b16 %v125
  %v229 = vunpack.c.l.b16 %v126
  %v230 = vunpack.c.l.b16 %v127
  %v231 = vunpack.c.l.b16 %v128
  %v232 = vunpack.c.l.b16 %v129
  %v233 = vunpack.c.l.b16 %v130
  %v234 = vunpack.c.l.b16 %v131
  %v235 = vunpack.c.l.b16 %v132
  %v236 = vunpack.c.l.b16 %v133
  %v237 = vunpack.c.l.b16 %v134
  %v238 = vunpack.c.l.b16 %v135
  %v239 = vunpack.c.l.b16 %v136
  %v240 = vpack.c.b16 %v193, %v192
  %v241 = vpack.c.b16 %v195, %v194
  %v242 = vpack.c.b16 %v197, %v196
  %v243 = vpack.c.b16 %v199, %v198
  %v244 = vpack.c.b16 %v201, %v200
  %v245 = vpack.c.b16 %v203, %v202
  %v246 = vpack.c.b16 %v205, %v204
  %v247 = vpack.c.b16 %v207, %v206
  %v248 = vpack.c.b16 %v209, %v208
  %v249 = vpack.c.b16 %v211, %v210
  %v250 = vpack.c.b16 %v213, %v212
  %v251 = vpack.c.b16 %v215, %v214
  %v252 = vpack.c.b16 %v217, %v216
  %v253 = vpack.c.b16 %v219, %v218
  %v254 = vpack.c.b16 %v221, %v220
  %v255 = vpack.c.b16 %v223, %v222
  %v256 = vpack.c.b16 %v225, %v224
  %v257 = vpack.c.b16 %v227, %v226
  %v258 = vpack.c.b16 %v229, %v228
  %v259 = vpack.c.b16 %v231, %v230
  %v260 = vpack.c.b16 %v233, %v232
  %v261 = vpack.c.b16 %v235, %v234
  %v262 = vpack.c.b16 %v237, %v236
  %v263 = vpack.c.b16 %v239, %v238
  %288 = vmatprep.subr.bf16.mxu0 0
  %289 = vmatpush1.bf16.msra.mxu0 %v247
  %290 = vmatprep.subr.bf16.mxu0 0
  %291 = vmatpush1.bf16.msra.mxu0 %v246
  %292 = vmatprep.subr.bf16.mxu0 0
  %293 = vmatpush1.bf16.msra.mxu0 %v245
  %294 = vmatprep.subr.bf16.mxu0 0
  %295 = vmatpush1.bf16.msra.mxu0 %v244
  %296 = vmatprep.subr.bf16.mxu0 0
  %297 = vmatpush1.bf16.msra.mxu0 %v243
  %298 = vmatprep.subr.bf16.mxu0 0
  %299 = vmatpush1.bf16.msra.mxu0 %v242
  %300 = vmatprep.subr.bf16.mxu0 0
  %301 = vmatpush1.bf16.msra.mxu0 %v241
  %302 = vmatprep.subr.bf16.mxu0 0
  %303 = vmatpush1.bf16.msra.mxu0 %v240
  %304 = vmatprep.subr.bf16.mxu0 0
  %305 = vmatpush2.bf16.msra.mxu0 %v255
  %306 = vmatprep.subr.bf16.mxu0 0
  %307 = vmatpush2.bf16.msra.mxu0 %v254
  %308 = vmatprep.subr.bf16.mxu0 0
  %309 = vmatpush2.bf16.msra.mxu0 %v253
  %310 = vmatprep.subr.bf16.mxu0 0
  %311 = vmatpush2.bf16.msra.mxu0 %v252
  %312 = vmatprep.subr.bf16.mxu0 0
  %313 = vmatpush2.bf16.msra.mxu0 %v251
  %314 = vmatprep.subr.bf16.mxu0 0
  %315 = vmatpush2.bf16.msra.mxu0 %v250
  %316 = vmatprep.subr.bf16.mxu0 0
  %317 = vmatpush2.bf16.msra.mxu0 %v249
  %318 = vmatprep.subr.bf16.mxu0 0
  %319 = vmatpush2.bf16.msra.mxu0 %v248
  %320 = vmatprep.mubr.bf16.mxu0 %v84
  %321 = vmatmul.mubr.bf16.gmra.mxu0 %v83
  %v322 = vpop.f32.mrf.mxu0
  %v323 = vadd.f32 %v142, %v322
  %v324 = vpop.f32.mrf.mxu0
  %v325 = vpop.f32.mrf.mxu0
  %v326 = vadd.f32 %v142, %v325
  %v327 = vpop.f32.mrf.mxu0
  %328 = vmatprep.mubr.bf16.mxu0 %v87
  %329 = vmatmul.mubr.bf16.gmra.mxu0 %v86
  %v330 = vpop.f32.mrf.mxu0
  %v331 = vadd.f32 %v142, %v330
  %v332 = vpop.f32.mrf.mxu0
  %v333 = vpop.f32.mrf.mxu0
  %v334 = vadd.f32 %v142, %v333
  %v335 = vpop.f32.mrf.mxu0
  %336 = vdwg.mxu0
  %337 = vmatprep.subr.bf16.mxu0 0
  %338 = vmatpush1.bf16.msra.mxu0 %v263
  %339 = vmatprep.subr.bf16.mxu0 0
  %340 = vmatpush1.bf16.msra.mxu0 %v262
  %341 = vmatprep.subr.bf16.mxu0 0
  %342 = vmatpush1.bf16.msra.mxu0 %v261
  %343 = vmatprep.subr.bf16.mxu0 0
  %344 = vmatpush1.bf16.msra.mxu0 %v260
  %345 = vmatprep.subr.bf16.mxu0 0
  %346 = vmatpush1.bf16.msra.mxu0 %v259
  %347 = vmatprep.subr.bf16.mxu0 0
  %348 = vmatpush1.bf16.msra.mxu0 %v258
  %349 = vmatprep.subr.bf16.mxu0 0
  %350 = vmatpush1.bf16.msra.mxu0 %v257
  %351 = vmatprep.subr.bf16.mxu0 0
  %352 = vmatpush1.bf16.msra.mxu0 %v256
  %353 = vmatprep.subr.bf16.mxu0 0
  %354 = vmatpush2.bf16.msra.mxu0 0
  %355 = vmatprep.subr.bf16.mxu0 0
  %356 = vmatpush2.bf16.msra.mxu0 0
  %357 = vmatprep.subr.bf16.mxu0 0
  %358 = vmatpush2.bf16.msra.mxu0 0
  %359 = vmatprep.subr.bf16.mxu0 0
  %360 = vmatpush2.bf16.msra.mxu0 0
  %361 = vmatprep.subr.bf16.mxu0 0
  %362 = vmatpush2.bf16.msra.mxu0 0
  %363 = vmatprep.subr.bf16.mxu0 0
  %364 = vmatpush2.bf16.msra.mxu0 0
  %365 = vmatprep.subr.bf16.mxu0 0
  %366 = vmatpush2.bf16.msra.mxu0 0
  %367 = vmatprep.subr.bf16.mxu0 0
  %368 = vmatpush2.bf16.msra.mxu0 0
  %369 = vmatprep.mubr.bf16.mxu0 0
  %370 = vmatmul.mubr.bf16.gmra.mxu0 %v85
  %v371 = vpop.f32.mrf.mxu0
  %v372 = vadd.f32 %v323, %v371
  %v373 = vpop.f32.mrf.mxu0
  %v374 = vpop.f32.mrf.mxu0
  %v375 = vadd.f32 %v326, %v374
  %v376 = vpop.f32.mrf.mxu0
  %377 = vmatprep.mubr.bf16.mxu0 0
  %378 = vmatmul.mubr.bf16.gmra.mxu0 %v88
  %v379 = vpop.f32.mrf.mxu0
  %v380 = vadd.f32 %v331, %v379
  %v381 = vpop.f32.mrf.mxu0
  %v382 = vpop.f32.mrf.mxu0
  %v383 = vadd.f32 %v334, %v382
  %v384 = vpop.f32.mrf.mxu0
  %385 = vdwg.mxu0
  %v386 = vmax.f32 %v372, 0.0
  %v387 = vmax.f32 %v375, 0.0
  %v388 = vmax.f32 %v380, 0.0
  %v389 = vmax.f32 %v383, 0.0
  %v394 = vrot.slane %v386, 7
  %v395 = vrot.slane %v387, 7
  %v396 = vsel %vm37, %v394, %v395
  %v397 = vrot.slane %v388, 7
  %v398 = vrot.slane %v389, 7
  %v399 = vsel %vm37, %v397, %v398
  %404 = vst [vmem:[#allocation3] sm:$0xfe] %v394
  %405 = vst [vmem:[#allocation3 + $0x18] sm:$0xff] %v396
  %406 = vst [vmem:[#allocation3 + $0x30] sm:$0xfe] %v397
  %407 = vst [vmem:[#allocation3 + $0x48] sm:$0xff] %v399
  %408 = vst [vmem:[#allocation3 + $0x8] sm:$0xff] %v386
  %409 = vst [vmem:[#allocation3 + $0x20] sm:$0xff] %v387
  %410 = vst [vmem:[#allocation3 + $0x38] sm:$0xff] %v388
  %411 = vst [vmem:[#allocation3 + $0x50] sm:$0xff] %v389
  %v412 = vrot.slane %v386, 1
  %v413 = vrot.slane %v387, 1
  %v414 = vsel %vm56, %v412, %v413
  %v415 = vrot.slane %v388, 1
  %v416 = vrot.slane %v389, 1
  %v417 = vsel %vm56, %v415, %v416
  %422 = vst [vmem:[#allocation3 + $0x10] sm:$0xff] %v414
  %423 = vst [vmem:[#allocation3 + $0x28] sm:$0x7f] %v413
  %424 = vst [vmem:[#allocation3 + $0x40] sm:$0xff] %v417
  %425 = vst [vmem:[#allocation3 + $0x58] sm:$0x7f] %v416
  %v426 = vld [vmem:[#allocation3] sm:$0xff]
  %v427 = vld [vmem:[#allocation3 + $0x8] sm:$0xff]
  %v428 = vld [vmem:[#allocation3 + $0x10] sm:$0xff]
  %v429 = vld [vmem:[#allocation3 + $0x18] sm:$0xff]
  %v430 = vld [vmem:[#allocation3 + $0x20] sm:$0xff]
  %v431 = vld [vmem:[#allocation3 + $0x28] sm:$0xff]
  %v432 = vld [vmem:[#allocation3 + $0x30] sm:$0xff]
  %v433 = vld [vmem:[#allocation3 + $0x38] sm:$0xff]
  %v434 = vld [vmem:[#allocation3 + $0x40] sm:$0xff]
  %v435 = vld [vmem:[#allocation3 + $0x48] sm:$0xff]
  %v436 = vld [vmem:[#allocation3 + $0x50] sm:$0xff]
  %v437 = vld [vmem:[#allocation3 + $0x58] sm:$0xff]
  %v438 = vpack.c.bf16 %v429, %v426
  %v439 = vpack.c.bf16 %v430, %v427
  %v440 = vpack.c.bf16 %v431, %v428
  %v441 = vpack.c.bf16 %v435, %v432
  %v442 = vpack.c.bf16 %v436, %v433
  %v443 = vpack.c.bf16 %v437, %v434
  %v444 = vld [vmem:[%s3] sm:$0xf]
  %v445 = vld [vmem:[%s3 + $0x4] sm:$0xf]
  %v446 = vld [vmem:[%s3 + $0x8] sm:$0xf]
  %v447 = vld [vmem:[%s3 + $0xc] sm:$0xf]
  %v448 = vld [vmem:[%s3 + $0x10] sm:$0xf]
  %v449 = vld [vmem:[%s3 + $0x14] sm:$0xf]
  %v450 = vld [vmem:[%s3 + $0x18] sm:$0xf]
  %v451 = vld [vmem:[%s3 + $0x1c] sm:$0xf]
  %v452 = vld [vmem:[%s3 + $0x20] sm:$0xf]
  %v453 = vld [vmem:[%s3 + $0x24] sm:$0xf]
  %v454 = vld [vmem:[%s3 + $0x28] sm:$0xf]
  %v455 = vld [vmem:[%s3 + $0x2c] sm:$0xf]
  %v456 = vld [vmem:[%s3 + $0x30] sm:$0xf]
  %v457 = vld [vmem:[%s3 + $0x34] sm:$0xf]
  %v458 = vld [vmem:[%s3 + $0x38] sm:$0xf]
  %v459 = vld [vmem:[%s3 + $0x3c] sm:$0xf]
  %v460 = vld [vmem:[%s3 + $0x40] sm:$0xf]
  %v461 = vld [vmem:[%s3 + $0x44] sm:$0xf]
  %v462 = vld [vmem:[%s3 + $0x48] sm:$0xf]
  %v463 = vld [vmem:[%s3 + $0x4c] sm:$0xf]
  %v464 = vld [vmem:[%s3 + $0x50] sm:$0xf]
  %v465 = vld [vmem:[%s3 + $0x54] sm:$0xf]
  %v466 = vld [vmem:[%s3 + $0x58] sm:$0xf]
  %v467 = vld [vmem:[%s3 + $0x5c] sm:$0xf]
  %v468 = vld [vmem:[%s3 + $0x60] sm:$0xf]
  %v469 = vld [vmem:[%s3 + $0x64] sm:$0xf]
  %v470 = vld [vmem:[%s3 + $0x68] sm:$0xf]
  %v471 = vld [vmem:[%s3 + $0x6c] sm:$0xf]
  %v472 = vld [vmem:[%s3 + $0x70] sm:$0xf]
  %v473 = vld [vmem:[%s3 + $0x74] sm:$0xf]
  %v474 = vld [vmem:[%s3 + $0x78] sm:$0xf]
  %v475 = vld [vmem:[%s3 + $0x7c] sm:$0xf]
  %v476 = vld [vmem:[%s3 + $0x80] sm:$0xf]
  %v477 = vld [vmem:[%s3 + $0x84] sm:$0xf]
  %v478 = vld [vmem:[%s3 + $0x88] sm:$0xf]
  %v479 = vld [vmem:[%s3 + $0x8c] sm:$0xf]
  %v480 = vld [vmem:[%s3 + $0x90] sm:$0xf]
  %v481 = vld [vmem:[%s3 + $0x94] sm:$0xf]
  %v482 = vld [vmem:[%s3 + $0x98] sm:$0xf]
  %v483 = vld [vmem:[%s3 + $0x9c] sm:$0xf]
  %v484 = vld [vmem:[%s3 + $0xa0] sm:$0xf]
  %v485 = vld [vmem:[%s3 + $0xa4] sm:$0xf]
  %v486 = vld [vmem:[%s3 + $0xa8] sm:$0xf]
  %v487 = vld [vmem:[%s3 + $0xac] sm:$0xf]
  %v488 = vld [vmem:[%s3 + $0xb0] sm:$0xf]
  %v489 = vld [vmem:[%s3 + $0xb4] sm:$0xf]
  %v490 = vld [vmem:[%s3 + $0xb8] sm:$0xf]
  %v491 = vld [vmem:[%s3 + $0xbc] sm:$0xf]
  %v492 = vld [vmem:[%s4] sm:$0x1]
  %v494 = vlaneseq
  %v495 = vshrl.u32 %v494, 7
  %v496 = vsub.s32 0, %v495
  %v497 = vrot.slane %v492, %v496
  %v547 = vunpack.c.l.b16 %v444
  %v548 = vunpack.c.l.b16 %v445
  %v549 = vunpack.c.l.b16 %v446
  %v550 = vunpack.c.l.b16 %v447
  %v551 = vunpack.c.l.b16 %v448
  %v552 = vunpack.c.l.b16 %v449
  %v553 = vunpack.c.l.b16 %v450
  %v554 = vunpack.c.l.b16 %v451
  %v555 = vunpack.c.l.b16 %v452
  %v556 = vunpack.c.l.b16 %v453
  %v557 = vunpack.c.l.b16 %v454
  %v558 = vunpack.c.l.b16 %v455
  %v559 = vunpack.c.l.b16 %v456
  %v560 = vunpack.c.l.b16 %v457
  %v561 = vunpack.c.l.b16 %v458
  %v562 = vunpack.c.l.b16 %v459
  %v563 = vunpack.c.l.b16 %v460
  %v564 = vunpack.c.l.b16 %v461
  %v565 = vunpack.c.l.b16 %v462
  %v566 = vunpack.c.l.b16 %v463
  %v567 = vunpack.c.l.b16 %v464
  %v568 = vunpack.c.l.b16 %v465
  %v569 = vunpack.c.l.b16 %v466
  %v570 = vunpack.c.l.b16 %v467
  %v571 = vunpack.c.l.b16 %v468
  %v572 = vunpack.c.l.b16 %v469
  %v573 = vunpack.c.l.b16 %v470
  %v574 = vunpack.c.l.b16 %v471
  %v575 = vunpack.c.l.b16 %v472
  %v576 = vunpack.c.l.b16 %v473
  %v577 = vunpack.c.l.b16 %v474
  %v578 = vunpack.c.l.b16 %v475
  %v579 = vunpack.c.l.b16 %v476
  %v580 = vunpack.c.l.b16 %v477
  %v581 = vunpack.c.l.b16 %v478
  %v582 = vunpack.c.l.b16 %v479
  %v583 = vunpack.c.l.b16 %v480
  %v584 = vunpack.c.l.b16 %v481
  %v585 = vunpack.c.l.b16 %v482
  %v586 = vunpack.c.l.b16 %v483
  %v587 = vunpack.c.l.b16 %v484
  %v588 = vunpack.c.l.b16 %v485
  %v589 = vunpack.c.l.b16 %v486
  %v590 = vunpack.c.l.b16 %v487
  %v591 = vunpack.c.l.b16 %v488
  %v592 = vunpack.c.l.b16 %v489
  %v593 = vunpack.c.l.b16 %v490
  %v594 = vunpack.c.l.b16 %v491
  %v595 = vpack.c.b16 %v548, %v547
  %v596 = vpack.c.b16 %v550, %v549
  %v597 = vpack.c.b16 %v552, %v551
  %v598 = vpack.c.b16 %v554, %v553
  %v599 = vpack.c.b16 %v556, %v555
  %v600 = vpack.c.b16 %v558, %v557
  %v601 = vpack.c.b16 %v560, %v559
  %v602 = vpack.c.b16 %v562, %v561
  %v603 = vpack.c.b16 %v564, %v563
  %v604 = vpack.c.b16 %v566, %v565
  %v605 = vpack.c.b16 %v568, %v567
  %v606 = vpack.c.b16 %v570, %v569
  %v607 = vpack.c.b16 %v572, %v571
  %v608 = vpack.c.b16 %v574, %v573
  %v609 = vpack.c.b16 %v576, %v575
  %v610 = vpack.c.b16 %v578, %v577
  %v611 = vpack.c.b16 %v580, %v579
  %v612 = vpack.c.b16 %v582, %v581
  %v613 = vpack.c.b16 %v584, %v583
  %v614 = vpack.c.b16 %v586, %v585
  %v615 = vpack.c.b16 %v588, %v587
  %v616 = vpack.c.b16 %v590, %v589
  %v617 = vpack.c.b16 %v592, %v591
  %v618 = vpack.c.b16 %v594, %v593
  %643 = vmatprep.subr.bf16.mxu0 0
  %644 = vmatpush1.bf16.msra.mxu0 %v602
  %645 = vmatprep.subr.bf16.mxu0 0
  %646 = vmatpush1.bf16.msra.mxu0 %v601
  %647 = vmatprep.subr.bf16.mxu0 0
  %648 = vmatpush1.bf16.msra.mxu0 %v600
  %649 = vmatprep.subr.bf16.mxu0 0
  %650 = vmatpush1.bf16.msra.mxu0 %v599
  %651 = vmatprep.subr.bf16.mxu0 0
  %652 = vmatpush1.bf16.msra.mxu0 %v598
  %653 = vmatprep.subr.bf16.mxu0 0
  %654 = vmatpush1.bf16.msra.mxu0 %v597
  %655 = vmatprep.subr.bf16.mxu0 0
  %656 = vmatpush1.bf16.msra.mxu0 %v596
  %657 = vmatprep.subr.bf16.mxu0 0
  %658 = vmatpush1.bf16.msra.mxu0 %v595
  %659 = vmatprep.subr.bf16.mxu0 0
  %660 = vmatpush2.bf16.msra.mxu0 %v610
  %661 = vmatprep.subr.bf16.mxu0 0
  %662 = vmatpush2.bf16.msra.mxu0 %v609
  %663 = vmatprep.subr.bf16.mxu0 0
  %664 = vmatpush2.bf16.msra.mxu0 %v608
  %665 = vmatprep.subr.bf16.mxu0 0
  %666 = vmatpush2.bf16.msra.mxu0 %v607
  %667 = vmatprep.subr.bf16.mxu0 0
  %668 = vmatpush2.bf16.msra.mxu0 %v606
  %669 = vmatprep.subr.bf16.mxu0 0
  %670 = vmatpush2.bf16.msra.mxu0 %v605
  %671 = vmatprep.subr.bf16.mxu0 0
  %672 = vmatpush2.bf16.msra.mxu0 %v604
  %673 = vmatprep.subr.bf16.mxu0 0
  %674 = vmatpush2.bf16.msra.mxu0 %v603
  %675 = vmatprep.mubr.bf16.mxu0 %v439
  %676 = vmatmul.mubr.bf16.gmra.mxu0 %v438
  %v677 = vpop.f32.mrf.mxu0
  %v678 = vadd.f32 %v497, %v677
  %v679 = vpop.f32.mrf.mxu0
  %v680 = vpop.f32.mrf.mxu0
  %v681 = vadd.f32 %v497, %v680
  %v682 = vpop.f32.mrf.mxu0
  %683 = vmatprep.mubr.bf16.mxu0 %v442
  %684 = vmatmul.mubr.bf16.gmra.mxu0 %v441
  %v685 = vpop.f32.mrf.mxu0
  %v686 = vadd.f32 %v497, %v685
  %v687 = vpop.f32.mrf.mxu0
  %v688 = vpop.f32.mrf.mxu0
  %v689 = vadd.f32 %v497, %v688
  %v690 = vpop.f32.mrf.mxu0
  %691 = vdwg.mxu0
  %692 = vmatprep.subr.bf16.mxu0 0
  %693 = vmatpush1.bf16.msra.mxu0 %v618
  %694 = vmatprep.subr.bf16.mxu0 0
  %695 = vmatpush1.bf16.msra.mxu0 %v617
  %696 = vmatprep.subr.bf16.mxu0 0
  %697 = vmatpush1.bf16.msra.mxu0 %v616
  %698 = vmatprep.subr.bf16.mxu0 0
  %699 = vmatpush1.bf16.msra.mxu0 %v615
  %700 = vmatprep.subr.bf16.mxu0 0
  %701 = vmatpush1.bf16.msra.mxu0 %v614
  %702 = vmatprep.subr.bf16.mxu0 0
  %703 = vmatpush1.bf16.msra.mxu0 %v613
  %704 = vmatprep.subr.bf16.mxu0 0
  %705 = vmatpush1.bf16.msra.mxu0 %v612
  %706 = vmatprep.subr.bf16.mxu0 0
  %707 = vmatpush1.bf16.msra.mxu0 %v611
  %708 = vmatprep.subr.bf16.mxu0 0
  %709 = vmatpush2.bf16.msra.mxu0 0
  %710 = vmatprep.subr.bf16.mxu0 0
  %711 = vmatpush2.bf16.msra.mxu0 0
  %712 = vmatprep.subr.bf16.mxu0 0
  %713 = vmatpush2.bf16.msra.mxu0 0
  %714 = vmatprep.subr.bf16.mxu0 0
  %715 = vmatpush2.bf16.msra.mxu0 0
  %716 = vmatprep.subr.bf16.mxu0 0
  %717 = vmatpush2.bf16.msra.mxu0 0
  %718 = vmatprep.subr.bf16.mxu0 0
  %719 = vmatpush2.bf16.msra.mxu0 0
  %720 = vmatprep.subr.bf16.mxu0 0
  %721 = vmatpush2.bf16.msra.mxu0 0
  %722 = vmatprep.subr.bf16.mxu0 0
  %723 = vmatpush2.bf16.msra.mxu0 0
  %724 = vmatprep.mubr.bf16.mxu0 0
  %725 = vmatmul.mubr.bf16.gmra.mxu0 %v440
  %v726 = vpop.f32.mrf.mxu0
  %v727 = vadd.f32 %v678, %v726
  %v728 = vpop.f32.mrf.mxu0
  %v729 = vpop.f32.mrf.mxu0
  %v730 = vadd.f32 %v681, %v729
  %v731 = vpop.f32.mrf.mxu0
  %732 = vmatprep.mubr.bf16.mxu0 0
  %733 = vmatmul.mubr.bf16.gmra.mxu0 %v443
  %v734 = vpop.f32.mrf.mxu0
  %v735 = vadd.f32 %v686, %v734
  %v736 = vpop.f32.mrf.mxu0
  %v737 = vpop.f32.mrf.mxu0
  %v738 = vadd.f32 %v689, %v737
  %v739 = vpop.f32.mrf.mxu0
  %740 = vdwg.mxu0
  %v741 = vmax.f32 %v727, 0.0
  %v742 = vmax.f32 %v730, 0.0
  %v743 = vmax.f32 %v735, 0.0
  %v744 = vmax.f32 %v738, 0.0
  %745 = vst [vmem:[%s5] sm:$0xff] %v741
  %746 = vst [vmem:[%s5 + $0x8] sm:$0xff] %v742
  %747 = vst [vmem:[%s5 + $0x10] sm:$0xff] %v743
  %748 = vst [vmem:[%s5 + $0x18] sm:$0xff] %v744
  // Predicated region
  $region22: #{double_convolution.1} parent=0 // pred_check
    _
  $region23: #{double_convolution.1} parent=0 // pred_check_branch
    %750 = sbr.rel (0) target = $region25
  $region24: #{double_convolution.1} parent=0 // pred_region
    _
  $region25: #{double_convolution.1} parent=0 // pred_fallthru
    _
  // Predicated region
  $region26: #{double_convolution.1} parent=0 // pred_check
    _
  $region27: #{double_convolution.1} parent=0 // pred_check_branch
    %752 = sbr.rel (0) target = $region29
  $region28: #{double_convolution.1} parent=0 // pred_region
    _
  $region29: #{double_convolution.1} parent=0 // pred_fallthru
    _

</llo_original>
